<compile_context>
chip_gen: v7x
topology: tpu7x:2x2x1
jax: 0.10.0
libtpu: 0.0.40
codegen_flags: <defaults>
</compile_context>

<pallas_src>
import functools

import jax
import jax.numpy as jnp
from jax import lax
from jax.experimental import pallas as pl
from jax.experimental.pallas import tpu as pltpu

_LANES = 128


def _dist_kernel(zs_ref, zt_ref, out_ref, *, inv_temp, inv_c, eps, valid_b, tile_b):
    """One batch tile: writes sum over valid rows of (1 - pearson) to a (1,128) row."""
    zs = zs_ref[...].astype(jnp.float32)
    zt = zt_ref[...].astype(jnp.float32)
    if inv_temp != 1.0:            # trace-time branch (inv_temp is a Python float)
        zs = zs * inv_temp
        zt = zt * inv_temp

    es = jnp.exp(zs - jnp.max(zs, axis=1, keepdims=True))
    et = jnp.exp(zt - jnp.max(zt, axis=1, keepdims=True))

    sum_s = jnp.sum(es, axis=1, keepdims=True)          # (tb, 1)
    sum_t = jnp.sum(et, axis=1, keepdims=True)
    s_st = jnp.sum(es * et, axis=1, keepdims=True)
    s_ss = jnp.sum(es * es, axis=1, keepdims=True)
    s_tt = jnp.sum(et * et, axis=1, keepdims=True)

    # Per-row scalars only from here on (cheap, exact divides).
    r_s = 1.0 / sum_s
    r_t = 1.0 / sum_t

    # softmax rows sum to exactly 1 -> per-row mean is the constant 1/C:
    #   sum(ys*yt) - 1/C, sum(ys^2) - 1/C, sum(yt^2) - 1/C.
    num = r_s * r_t * s_st - inv_c
    ss = jnp.maximum(r_s * r_s * s_ss - inv_c, 0.0)      # clamp tiny negative cancellation
    st = jnp.maximum(r_t * r_t * s_tt - inv_c, 0.0)

    denom = jnp.sqrt(ss * st) + eps                      # matches reference eps placement
    one_minus = 1.0 - num / denom                        # (tb, 1)

    # Zero the contribution of rows past the true batch (ragged last tile).
    row = pl.program_id(0) * tile_b + lax.broadcasted_iota(jnp.int32, (tile_b, 1), 0)
    one_minus = jnp.where(row < valid_b, one_minus, 0.0)

    tile_sum = jnp.sum(one_minus)                        # rank-0
    out_ref[...] = tile_sum * jnp.ones((1, _LANES), jnp.float32)


def _round_up(x, m):
    return ((x + m - 1) // m) * m


def _vmem_capacity_bytes():
    try:
        return int(pltpu.get_tpu_info().vmem_capacity_bytes)
    except Exception:
        return 64 * 1024 * 1024   # v7x per-TensorCore capacity; safe floor everywhere.


def _choose_tile_b(C, in_bytes):
    """Largest batch tile keeping inputs (double-buffered, input dtype) plus the
    in-kernel f32 working set within a generation-aware VMEM budget."""
    cap = _vmem_capacity_bytes()
    budget = min(cap // 5, 24 * 1024 * 1024)
    # 2 inputs x 2 pipeline buffers at the input dtype + ~4 tile-sized f32 live values.
    per_row = 2 * 2 * C * in_bytes + 4 * C * 4
    tb = budget // max(per_row, 1)
    return max(8, (tb // 8) * 8)


def dist_loss(z_s, z_t, *, temp=1.0, tile_b=None, eps=1e-8):
    """DIST.forward(z_s, z_t, mask=None) -> scalar loss (intra term is 0)."""
    B, C = z_s.shape
    assert z_t.shape == (B, C)
    in_bytes = jnp.dtype(z_s.dtype).itemsize

    if tile_b is None:
        tile_b = _choose_tile_b(C, in_bytes)

    if B < 8:
        # Block equals the full (tiny) batch; avoids a block taller than the array.
        tile_b = B
    else:
        # Cap so the grid has >= 2 steps (both v7x TensorCores get work).
        half_b = _round_up(pl.cdiv(B, 2), 8)
        tile_b = int(max(8, min((tile_b // 8) * 8, half_b)))

    num_tiles = pl.cdiv(B, tile_b)
    cap = _vmem_capacity_bytes()
    vmem_limit = int(min(cap // 2, 48 * 1024 * 1024))

    kernel = functools.partial(
        _dist_kernel,
        inv_temp=float(1.0 / temp),
        inv_c=float(1.0 / C),
        eps=float(eps),
        valid_b=int(B),
        tile_b=int(tile_b),
    )

    # TODO(synk): for vocab-scale C a single full-C block may not fit VMEM; a
    # C-tiled / online-softmax two-pass variant is not implemented here.
    per_tile = pl.pallas_call(
        kernel,
        out_shape=jax.ShapeDtypeStruct((1, num_tiles * _LANES), jnp.float32),
        grid_spec=pltpu.PrefetchScalarGridSpec(
            num_scalar_prefetch=0,
            grid=(num_tiles,),
            in_specs=[
                pl.BlockSpec((tile_b, C), lambda i: (i, 0)),
                pl.BlockSpec((tile_b, C), lambda i: (i, 0)),
            ],
            out_specs=pl.BlockSpec((1, _LANES), lambda i: (0, i)),
        ),
        compiler_params=pltpu.CompilerParams(
            dimension_semantics=("parallel",),
            vmem_limit_bytes=vmem_limit,
        ),
    )(z_s, z_t)

    # Each tile's partial sum is replicated across its 128 output lanes.
    tile_sums = per_tile.reshape(num_tiles, _LANES)[:, 0]
    return (temp * temp) * (jnp.sum(tile_sums) / B)


def _dist_ref(z_s, z_t, temp=1.0, eps=1e-8):
    # pure-JAX reference (matches the PyTorch module's forward with mask=None).
    ys = jax.nn.softmax(z_s / temp, axis=1)
    yt = jax.nn.softmax(z_t / temp, axis=1)
    ys_c = ys - ys.mean(1, keepdims=True)
    yt_c = yt - yt.mean(1, keepdims=True)
    pear = (ys_c * yt_c).sum(1) / (
        jnp.linalg.norm(ys_c, axis=1) * jnp.linalg.norm(yt_c, axis=1) + eps
    )
    return temp ** 2 * (1.0 - pear.mean())


if __name__ == "__main__":
    key = jax.random.PRNGKey(0)
    k1, k2, k3, k4 = jax.random.split(key, 4)

    # Small aligned case: batch=16, classes=128.
    B, C = 16, 128
    z_s = jax.random.normal(k1, (B, C), dtype=jnp.float32)
    z_t = jax.random.normal(k2, (B, C), dtype=jnp.float32)
    loss = dist_loss(z_s, z_t, temp=1.0)
    jax.block_until_ready(loss)
    ref = _dist_ref(z_s, z_t, temp=1.0)
    assert jnp.allclose(loss, ref, atol=1e-5, rtol=1e-5), (loss, ref)

    # Ragged batch, non-multiple-of-128 class count, temp != 1 (exercises the
    # iota mask and the ragged last input block).
    B2, C2 = 19, 160
    z_s2 = jax.random.normal(k3, (B2, C2), dtype=jnp.float32)
    z_t2 = jax.random.normal(k4, (B2, C2), dtype=jnp.float32)
    loss2 = dist_loss(z_s2, z_t2, temp=4.0)
    jax.block_until_ready(loss2)
    ref2 = _dist_ref(z_s2, z_t2, temp=4.0)
    assert jnp.allclose(loss2, ref2, atol=1e-5, rtol=1e-5), (loss2, ref2)

    print("KERNEL_OK")
</pallas_src>

<mosaic_0001>
module attributes {stable_mosaic.version = 11 : i64} {
  func.func @_dist_kernel(%arg0: i32, %arg1: memref<8x128xf32, #tpu.memory_space<vmem>>, %arg2: memref<8x128xf32, #tpu.memory_space<vmem>>, %arg3: memref<1x128xf32, #tpu.memory_space<vmem>>) attributes {dimension_semantics = [#tpu.dimension_semantics<parallel>], iteration_bounds = array<i64: 2>, scalar_prefetch = 0 : i64, scratch_operands = 0 : i64, tpu.core_type = #tpu.core_type<tc>, window_params = [{transform_indices = @transform_0, window_bounds = array<i64: 8, 128>}, {transform_indices = @transform_1, window_bounds = array<i64: 8, 128>}, {transform_indices = @transform_2, window_bounds = array<i64: 1, 128>}]} {
    %c0 = arith.constant 0 : index
    %c0_0 = arith.constant 0 : index
    %0 = vector.load %arg1[%c0, %c0_0] : memref<8x128xf32, #tpu.memory_space<vmem>>, vector<8x128xf32>
    %c0_1 = arith.constant 0 : index
    %c0_2 = arith.constant 0 : index
    %1 = vector.load %arg2[%c0_1, %c0_2] : memref<8x128xf32, #tpu.memory_space<vmem>>, vector<8x128xf32>
    %cst = arith.constant dense<0xFF800000> : vector<8xf32>
    %2 = vector.multi_reduction <maximumf>, %0, %cst [1] : vector<8x128xf32> to vector<8xf32>
    %3 = vector.shape_cast %2 : vector<8xf32> to vector<8x1xf32>
    %4 = vector.broadcast %3 : vector<8x1xf32> to vector<8x128xf32>
    %5 = arith.subf %0, %4 : vector<8x128xf32>
    %6 = math.exp %5 : vector<8x128xf32>
    %cst_3 = arith.constant dense<0xFF800000> : vector<8xf32>
    %7 = vector.multi_reduction <maximumf>, %1, %cst_3 [1] : vector<8x128xf32> to vector<8xf32>
    %8 = vector.shape_cast %7 : vector<8xf32> to vector<8x1xf32>
    %9 = vector.broadcast %8 : vector<8x1xf32> to vector<8x128xf32>
    %10 = arith.subf %1, %9 : vector<8x128xf32>
    %11 = math.exp %10 : vector<8x128xf32>
    %cst_4 = arith.constant dense<0.000000e+00> : vector<8xf32>
    %12 = vector.multi_reduction <add>, %6, %cst_4 [1] : vector<8x128xf32> to vector<8xf32>
    %13 = vector.shape_cast %12 : vector<8xf32> to vector<8x1xf32>
    %cst_5 = arith.constant dense<0.000000e+00> : vector<8xf32>
    %14 = vector.multi_reduction <add>, %11, %cst_5 [1] : vector<8x128xf32> to vector<8xf32>
    %15 = vector.shape_cast %14 : vector<8xf32> to vector<8x1xf32>
    %16 = arith.mulf %6, %11 : vector<8x128xf32>
    %cst_6 = arith.constant dense<0.000000e+00> : vector<8xf32>
    %17 = vector.multi_reduction <add>, %16, %cst_6 [1] : vector<8x128xf32> to vector<8xf32>
    %18 = vector.shape_cast %17 : vector<8xf32> to vector<8x1xf32>
    %19 = arith.mulf %6, %6 : vector<8x128xf32>
    %cst_7 = arith.constant dense<0.000000e+00> : vector<8xf32>
    %20 = vector.multi_reduction <add>, %19, %cst_7 [1] : vector<8x128xf32> to vector<8xf32>
    %21 = vector.shape_cast %20 : vector<8xf32> to vector<8x1xf32>
    %22 = arith.mulf %11, %11 : vector<8x128xf32>
    %cst_8 = arith.constant dense<0.000000e+00> : vector<8xf32>
    %23 = vector.multi_reduction <add>, %22, %cst_8 [1] : vector<8x128xf32> to vector<8xf32>
    %24 = vector.shape_cast %23 : vector<8xf32> to vector<8x1xf32>
    %cst_9 = arith.constant 1.000000e+00 : f32
    %25 = vector.broadcast %cst_9 : f32 to vector<8x1xf32>
    %26 = arith.divf %25, %13 : vector<8x1xf32>
    %cst_10 = arith.constant 1.000000e+00 : f32
    %27 = vector.broadcast %cst_10 : f32 to vector<8x1xf32>
    %28 = arith.divf %27, %15 : vector<8x1xf32>
    %29 = arith.mulf %26, %28 : vector<8x1xf32>
    %30 = arith.mulf %29, %18 : vector<8x1xf32>
    %cst_11 = arith.constant 7.812500e-03 : f32
    %31 = vector.broadcast %cst_11 : f32 to vector<8x1xf32>
    %32 = arith.subf %30, %31 : vector<8x1xf32>
    %33 = arith.mulf %26, %26 : vector<8x1xf32>
    %34 = arith.mulf %33, %21 : vector<8x1xf32>
    %cst_12 = arith.constant 7.812500e-03 : f32
    %35 = vector.broadcast %cst_12 : f32 to vector<8x1xf32>
    %36 = arith.subf %34, %35 : vector<8x1xf32>
    %cst_13 = arith.constant 0.000000e+00 : f32
    %37 = vector.broadcast %cst_13 : f32 to vector<8x1xf32>
    %38 = arith.maximumf %36, %37 : vector<8x1xf32>
    %39 = arith.mulf %28, %28 : vector<8x1xf32>
    %40 = arith.mulf %39, %24 : vector<8x1xf32>
    %cst_14 = arith.constant 7.812500e-03 : f32
    %41 = vector.broadcast %cst_14 : f32 to vector<8x1xf32>
    %42 = arith.subf %40, %41 : vector<8x1xf32>
    %cst_15 = arith.constant 0.000000e+00 : f32
    %43 = vector.broadcast %cst_15 : f32 to vector<8x1xf32>
    %44 = arith.maximumf %42, %43 : vector<8x1xf32>
    %45 = arith.mulf %38, %44 : vector<8x1xf32>
    %46 = math.sqrt %45 : vector<8x1xf32>
    %cst_16 = arith.constant 9.99999993E-9 : f32
    %47 = vector.broadcast %cst_16 : f32 to vector<8x1xf32>
    %48 = arith.addf %46, %47 : vector<8x1xf32>
    %49 = arith.divf %32, %48 : vector<8x1xf32>
    %cst_17 = arith.constant 1.000000e+00 : f32
    %50 = vector.broadcast %cst_17 : f32 to vector<8x1xf32>
    %51 = arith.subf %50, %49 : vector<8x1xf32>
    %c8_i32 = arith.constant 8 : i32
    %52 = arith.muli %arg0, %c8_i32 : i32
    %53 = tpu.iota {dimensions = array<i32: 0>} : vector<8x1xi32>
    %54 = vector.broadcast %52 : i32 to vector<8x1xi32>
    %55 = arith.addi %54, %53 : vector<8x1xi32>
    %c16_i32 = arith.constant 16 : i32
    %56 = vector.broadcast %c16_i32 : i32 to vector<8x1xi32>
    %57 = arith.cmpi slt, %55, %56 : vector<8x1xi32>
    %cst_18 = arith.constant 0.000000e+00 : f32
    %58 = vector.broadcast %cst_18 : f32 to vector<8x1xf32>
    %59 = arith.select %57, %51, %58 : vector<8x1xi1>, vector<8x1xf32>
    %60 = vector.shape_cast %59 : vector<8x1xf32> to vector<1x8x1xf32>
    %cst_19 = arith.constant dense<0.000000e+00> : vector<1xf32>
    %61 = vector.multi_reduction <add>, %60, %cst_19 [1, 2] : vector<1x8x1xf32> to vector<1xf32>
    %62 = vector.shape_cast %61 : vector<1xf32> to vector<1x1x1xf32>
    %63 = vector.extract %62[0, 0, 0] : f32 from vector<1x1x1xf32>
    %cst_20 = arith.constant 1.000000e+00 : f32
    %64 = vector.broadcast %cst_20 : f32 to vector<1x128xf32>
    %65 = vector.broadcast %63 : f32 to vector<1x128xf32>
    %66 = arith.mulf %65, %64 : vector<1x128xf32>
    %c0_21 = arith.constant 0 : index
    %c0_22 = arith.constant 0 : index
    %67 = vector.load %arg3[%c0_21, %c0_22] : memref<1x128xf32, #tpu.memory_space<vmem>>, vector<1x128xf32>
    tpu.vector_store %arg3[%c0_21, %c0_22], %66 {strides = array<i32>} : memref<1x128xf32, #tpu.memory_space<vmem>>, vector<1x128xf32>,
    return
  }
  func.func @transform_0(%arg0: i32) -> (i32, i32) {
    %c0_i32 = arith.constant 0 : i32
    %c0_i32_0 = arith.constant 0 : i32
    return %arg0, %c0_i32 : i32, i32
  }
  func.func @transform_1(%arg0: i32) -> (i32, i32) {
    %c0_i32 = arith.constant 0 : i32
    %c0_i32_0 = arith.constant 0 : i32
    return %arg0, %c0_i32 : i32, i32
  }
  func.func @transform_2(%arg0: i32) -> (i32, i32) {
    %c0_i32 = arith.constant 0 : i32
    %c0_i32_0 = arith.constant 0 : i32
    return %c0_i32, %arg0 : i32, i32
  }
}

</mosaic_0001>

<llo_original>
// kernel: tpu_custom_call.1
$region0: #{tpu_custom_call.1}
  #allocation0 [shape = 'u32[]', space=smem, size = 0x4, offset = 0x4, fixed_abs, tag = 'smem constant byte address 0x4 - core index']
  #allocation1 [shape = 'u32[144,128]{1,0:T(1,128)}', space=vmem, size = 0x12000, scoped, tag = 'internal scratch']
  %s0 = inlined_call_operand.hbm [shape: f32[16,128], index: 0, kind: input, shape index: {}]
  %s1 = inlined_call_operand.hbm [shape: f32[16,128], index: 1, kind: input, shape index: {}]
  %s2 = inlined_call_operand.hbm [shape: f32[1,256], index: 2, kind: output, shape index: {}]
  %s3 = sld [smem:[#allocation0]]
  $region49: #{tpu_custom_call.1} parent=0
    _
  %s5 = ssub.s32 1, %s3
  %s6 = scalar_select 0, %s5, %s3
  $region1: #{tpu_custom_call.1} parent=0
    #allocation2 [shape = 'u8[8192]{0}', space=vmem, size = 0x2000, scoped, tag = 'input window, operand 0']
    #allocation3 [shape = 's32[2]{0}', space=sflag, size = 0x8, scoped, tag = 'scoped memory for tpu_custom_call.1']
    #allocation4 [shape = 's32[2]{0}', space=sflag, size = 0x8, scoped, tag = 'scoped memory for tpu_custom_call.1']
    #allocation5 [shape = 'u8[8192]{0}', space=vmem, size = 0x2000, scoped, tag = 'input window, operand 1']
    #allocation6 [shape = 's32[2]{0}', space=sflag, size = 0x8, scoped, tag = 'scoped memory for tpu_custom_call.1']
    #allocation7 [shape = 'u8[1024]{0}', space=vmem, size = 0x400, scoped, tag = 'output window, operand 0']
    %7 = vsyncpa [#allocation3], 0
    %s8 = scalar_lea.sflag [#allocation3], 1
    %9 = vsyncpa %s8, 0
    %10 = vsyncpa [#allocation6], 0
    %s11 = scalar_lea.sflag [#allocation6], 1
    %12 = vsyncpa %s11, 0
    %13 = vsyncpa [#allocation4], 0
    %s14 = scalar_lea.sflag [#allocation4], 1
    %15 = vsyncpa %s14, 0
    loop: start=0, step=1, limit=4
    $region2: #{tpu_custom_call.1} parent=1 // loop_pre_header
      _
    $region3: #{tpu_custom_call.1} parent=1 // loop_header
      %s17 = sphi 0, %s21
      %p18 = scmp.ge.s32.totalorder %s17, 4
      %s27 = sphi 0, %s29
      %s30 = sphi 0, %s27
      %s31 = sphi 0, %s30
      %s47 = sphi 0, %s31
      %s53 = sphi 0, %s55
      %s56 = sphi 0, %s53
      %s57 = sphi 0, %s56
      %s73 = sphi 0, %s57
      %s79 = sphi 0, %s81
      %s82 = sphi 0, %s79
      %s83 = sphi 0, %s82
      %s99 = sphi 0, %s83
    $region4: #{tpu_custom_call.1} parent=1 // loop_header_branch
      %20 = sbr.rel (%p18) target = $region8
    $region5: #{tpu_custom_call.1} parent=1 // loop_body
      %s22 = ssub.s32 %s17, 1
      %s23 = ssub.s32 %s17, 2
      %s24 = sadd.s32 %s17, 1
      %s25 = ssub.s32 %s17, %s24
      %p26 = scmp.eq.s32.totalorder %s25, 0
      %s28 = sadd.s32 %s27, 1
      %s29 = scalar_select %p26, %s27, %s28
      %p32 = pneg %p26
      %p33 = scmp.eq.s32.totalorder %s17, 1
      %p34 = por %p32, %p33
      %p35 = scmp.ne.s32.totalorder %s27, %s30
      %p36 = scmp.eq.s32.totalorder %s17, 0
      %p37 = por %p35, %p36
      %p38 = scmp.ne.s32.totalorder %s27, %s30
      %p39 = scmp.eq.s32.totalorder %s22, 1
      %p40 = por %p38, %p39
      %p41 = scmp.ne.s32.totalorder %s30, %s31
      %p42 = scmp.eq.s32.totalorder %s22, 0
      %p43 = por %p41, %p42
      %p44 = scmp.ne.s32.totalorder %s30, %s31
      %p45 = scmp.eq.s32.totalorder %s23, 1
      %p46 = por %p44, %p45
      %p48 = scmp.ne.s32.totalorder %s31, %s47
      %p49 = scmp.eq.s32.totalorder %s23, 0
      %p50 = por %p48, %p49
      %s51 = ssub.s32 %s17, %s24
      %p52 = scmp.eq.s32.totalorder %s51, 0
      %s54 = sadd.s32 %s53, 1
      %s55 = scalar_select %p52, %s53, %s54
      %p58 = pneg %p52
      %p59 = scmp.eq.s32.totalorder %s17, 1
      %p60 = por %p58, %p59
      %p61 = scmp.ne.s32.totalorder %s53, %s56
      %p62 = scmp.eq.s32.totalorder %s17, 0
      %p63 = por %p61, %p62
      %p64 = scmp.ne.s32.totalorder %s53, %s56
      %p65 = scmp.eq.s32.totalorder %s22, 1
      %p66 = por %p64, %p65
      %p67 = scmp.ne.s32.totalorder %s56, %s57
      %p68 = scmp.eq.s32.totalorder %s22, 0
      %p69 = por %p67, %p68
      %p70 = scmp.ne.s32.totalorder %s56, %s57
      %p71 = scmp.eq.s32.totalorder %s23, 1
      %p72 = por %p70, %p71
      %p74 = scmp.ne.s32.totalorder %s57, %s73
      %p75 = scmp.eq.s32.totalorder %s23, 0
      %p76 = por %p74, %p75
      %s77 = ssub.s32 %s17, %s24
      %p78 = scmp.eq.s32.totalorder %s77, 0
      %s80 = sadd.s32 %s79, 1
      %s81 = scalar_select %p78, %s79, %s80
      %p84 = pneg %p78
      %p85 = scmp.eq.s32.totalorder %s17, 1
      %p86 = por %p84, %p85
      %p87 = scmp.ne.s32.totalorder %s79, %s82
      %p88 = scmp.eq.s32.totalorder %s17, 0
      %p89 = por %p87, %p88
      %p90 = scmp.ne.s32.totalorder %s79, %s82
      %p91 = scmp.eq.s32.totalorder %s22, 1
      %p92 = por %p90, %p91
      %p93 = scmp.ne.s32.totalorder %s82, %s83
      %p94 = scmp.eq.s32.totalorder %s22, 0
      %p95 = por %p93, %p94
      %p96 = scmp.ne.s32.totalorder %s82, %s83
      %p97 = scmp.eq.s32.totalorder %s23, 1
      %p98 = por %p96, %p97
      %p100 = scmp.ne.s32.totalorder %s83, %s99
      %p101 = scmp.eq.s32.totalorder %s23, 0
      %p102 = por %p100, %p101
      %p103 = scmp.le.s32.totalorder 1, %s17
      %p104 = scmp.lt.s32.totalorder %s17, 3
      %p105 = pnand %p103, %p104
      %p106 = pneg %p105
      // Predicated region
      $region9: #{tpu_custom_call.1} parent=5 // pred_check
        _
      $region10: #{tpu_custom_call.1} parent=5 // pred_check_branch
        %108 = sbr.rel (%p105) target = $region12
      $region11: #{tpu_custom_call.1} parent=5 // pred_region
        %s109 = ssub.s32 %s17, 1
      $region12: #{tpu_custom_call.1} parent=5 // pred_fallthru
        _
      %p110 = scmp.lt.s32.totalorder %s17, 2
      // Predicated region
      $region13: #{tpu_custom_call.1} parent=5 // pred_check
        %p111 = pneg %p110
      $region14: #{tpu_custom_call.1} parent=5 // pred_check_branch
        %113 = sbr.rel (%p111) target = $region16
      $region15: #{tpu_custom_call.1} parent=5 // pred_region
        // Predicated region
        $region17: #{tpu_custom_call.1} parent=15 // pred_check
          %p114 = pneg %p37
        $region18: #{tpu_custom_call.1} parent=15 // pred_check_branch
          %116 = sbr.rel (%p114) target = $region20
        $region19: #{tpu_custom_call.1} parent=15 // pred_region
          %s117 = sand.u32 %s27, 1
          %s118 = scalar_lea.sflag [#allocation3], %s117
          %s119 = sand.u32 %s27, 1
          %s120 = smul.addr %s119, 8
          %s121 = scalar_lea.vmem [#allocation2], %s120
          %s123 = ssub.s32 128, 128
          %124 = vsyncadd %s118, %s123
          %s125 = smul.addr %s17, 128
          %s126 = scalar_lea.hbm %s0, %s125
          %s128 = sshll.u32 %s121, 4
          %s129 = int_to_ptr.vmem [resolvable:$true] %s128
          %131 = dma.hbm_to_vmem [thread:$0]  %s126, 128, %s129, %s118
        $region20: #{tpu_custom_call.1} parent=15 // pred_fallthru
          _
        // Predicated region
        $region21: #{tpu_custom_call.1} parent=15 // pred_check
          %p132 = pneg %p63
        $region22: #{tpu_custom_call.1} parent=15 // pred_check_branch
          %134 = sbr.rel (%p132) target = $region24
        $region23: #{tpu_custom_call.1} parent=15 // pred_region
          %s135 = sand.u32 %s53, 1
          %s136 = scalar_lea.sflag [#allocation6], %s135
          %s137 = sand.u32 %s53, 1
          %s138 = smul.addr %s137, 8
          %s139 = scalar_lea.vmem [#allocation5], %s138
          %s141 = ssub.s32 128, 128
          %142 = vsyncadd %s136, %s141
          %s143 = smul.addr %s17, 128
          %s144 = scalar_lea.hbm %s1, %s143
          %s146 = sshll.u32 %s139, 4
          %s147 = int_to_ptr.vmem [resolvable:$true] %s146
          %149 = dma.hbm_to_vmem [thread:$0]  %s144, 128, %s147, %s136
        $region24: #{tpu_custom_call.1} parent=15 // pred_fallthru
          _
      $region16: #{tpu_custom_call.1} parent=5 // pred_fallthru
        _
      %p150 = scmp.le.s32.totalorder 1, %s17
      %p151 = scmp.lt.s32.totalorder %s17, 3
      %p152 = pnand %p150, %p151
      %p153 = pneg %p152
      // Predicated region
      $region25: #{tpu_custom_call.1} parent=5 // pred_check
        _
      $region26: #{tpu_custom_call.1} parent=5 // pred_check_branch
        %155 = sbr.rel (%p152) target = $region28
      $region27: #{tpu_custom_call.1} parent=5 // pred_region
        %s156 = ssub.s32 %s17, 1
        %s157 = sand.u32 %s30, 1
        %s158 = scalar_lea.sflag [#allocation3], %s157
        %s159 = sand.u32 %s30, 1
        %s160 = smul.addr %s159, 8
        %s161 = scalar_lea.vmem [#allocation2], %s160
        // Predicated region
        $region29: #{tpu_custom_call.1} parent=27 // pred_check
          %p162 = pneg %p43
        $region30: #{tpu_custom_call.1} parent=27 // pred_check_branch
          %164 = sbr.rel (%p162) target = $region32
        $region31: #{tpu_custom_call.1} parent=27 // pred_region
          %165 = dma.done %s158, 128
        $region32: #{tpu_custom_call.1} parent=27 // pred_fallthru
          _
        %s166 = sand.u32 %s56, 1
        %s167 = scalar_lea.sflag [#allocation6], %s166
        %s168 = sand.u32 %s56, 1
        %s169 = smul.addr %s168, 8
        %s170 = scalar_lea.vmem [#allocation5], %s169
        // Predicated region
        $region33: #{tpu_custom_call.1} parent=27 // pred_check
          %p171 = pneg %p69
        $region34: #{tpu_custom_call.1} parent=27 // pred_check_branch
          %173 = sbr.rel (%p171) target = $region36
        $region35: #{tpu_custom_call.1} parent=27 // pred_region
          %174 = dma.done %s167, 128
        $region36: #{tpu_custom_call.1} parent=27 // pred_fallthru
          _
        %s175 = sand.u32 %s30, 1
        %s176 = scalar_lea.sflag [#allocation3], %s175
        %s177 = sand.u32 %s30, 1
        %s178 = smul.addr %s177, 8
        %s179 = scalar_lea.vmem [#allocation2], %s178
        %p180 = pneg %p43
        %p181 = pneg %p40
        %s182 = sand.u32 %s56, 1
        %s183 = scalar_lea.sflag [#allocation6], %s182
        %s184 = sand.u32 %s56, 1
        %s185 = smul.addr %s184, 8
        %s186 = scalar_lea.vmem [#allocation5], %s185
        %p187 = pneg %p69
        %p188 = pneg %p66
        %p189 = pneg %p95
        %p190 = pneg %p92
        %s191 = sand.u32 %s82, 1
        %s192 = scalar_lea.sflag [#allocation4], %s191
        %s193 = sand.u32 %s82, 1
        %s194 = scalar_lea.vmem [#allocation7], %s193
        %v195 = vld [vmem:[%s161] sm:$0xff]
        %v196 = vld [vmem:[%s170] sm:$0xff]
        %197 = vmax.xlane.f32.xlu0 %v195
        %v198 = vpop.xlane.xlu0 %197
        %v199 = vsub.f32 %v195, %v198
        %v200 = vmul.f32 %v199, 1.442695
        %v201 = vpow.pop %v200
        %202 = vmax.xlane.f32.xlu0 %v196
        %v203 = vpop.xlane.xlu0 %202
        %v204 = vsub.f32 %v196, %v203
        %v205 = vmul.f32 %v204, 1.442695
        %v206 = vpow.pop %v205
        %207 = vadd.xlane.f32.xlu0 %v201
        %v208 = vpop.xlane.xlu0 %207
        %209 = vadd.xlane.f32.xlu0 %v206
        %v210 = vpop.xlane.xlu0 %209
        %v211 = vmul.f32 %v201, %v206
        %212 = vadd.xlane.f32.xlu0 %v211
        %v213 = vpop.xlane.xlu0 %212
        %v214 = vmul.f32 %v201, %v201
        %215 = vadd.xlane.f32.xlu0 %v214
        %v216 = vpop.xlane.xlu0 %215
        %v217 = vmul.f32 %v206, %v206
        %218 = vadd.xlane.f32.xlu0 %v217
        %v219 = vpop.xlane.xlu0 %218
        %v220 = vrcp.pop %v208
        %v221 = vmul.f32 1.0, %v220
        %v222 = vrcp.pop %v210
        %v223 = vmul.f32 1.0, %v222
        %v224 = vmul.f32 %v221, %v223
        %v225 = vmul.f32 %v224, %v213
        %v226 = vsub.f32 %v225, 0.0078125
        %v227 = vmul.f32 %v221, %v221
        %v228 = vmul.f32 %v227, %v216
        %v229 = vsub.f32 %v228, 0.0078125
        %v230 = vmax.f32 %v229, 0.0
        %v231 = vmul.f32 %v223, %v223
        %v232 = vmul.f32 %v231, %v219
        %v233 = vsub.f32 %v232, 0.0078125
        %v234 = vmax.f32 %v233, 0.0
        %v235 = vmul.f32 %v230, %v234
        %v236 = vrsqrt.pop %v235
        %v237 = vmul.f32 %v235, %v236
        %vm238 = vcmp.eq.f32.partialorder %v235, inf
        %v239 = vsel %vm238, %v235, %v237
        %vm240 = vcmp.eq.f32.partialorder %v235, 0.0
        %v241 = vand.u32 %v235, 2147483648
        %v242 = vsel %vm240, %v241, %v239
        %v243 = vadd.f32 %v242, 1e-08
        %v244 = vrcp.pop %v243
        %v245 = vmul.f32 %v226, %v244
        %v246 = vsub.f32 1.0, %v245
        %s247 = smul.u32 %s22, 8
        %v248 = vlaneseq
        %v249 = vshrl.u32 %v248, 7
        %v250 = vstv %s247
        %v251 = vadd.s32 %v250, %v249
        %vm252 = vcmp.lt.s32.totalorder %v251, 16
        %v253 = vsel %vm252, %v246, 0.0
        %vm254 = vcmask 7168
        %v255 = vsel %vm254, %v253, 0.0
        %256 = vadd.xlane.f32.xlu0 %v255
        %v257 = vpop.xlane.xlu0 %256
        %v258 = vrot.slane %v257, 4
        %v259 = vadd.f32 %v257, %v258
        %v260 = vrot.slane %v259, 2
        %v261 = vadd.f32 %v259, %v260
        %v262 = vrot.slane %v261, 1
        %v263 = vadd.f32 %v261, %v262
        %s264 = vtos %v263
        %v265 = vstv %s264
        %266 = vst [vmem:[%s194] sm:$0x1] %v265
        %s267 = sand.u32 %s82, 1
        %s268 = scalar_lea.sflag [#allocation4], %s267
        %s269 = sand.u32 %s82, 1
        %s270 = scalar_lea.vmem [#allocation7], %s269
        // Predicated region
        $region37: #{tpu_custom_call.1} parent=27 // pred_check
          %p271 = pneg %p92
        $region38: #{tpu_custom_call.1} parent=27 // pred_check_branch
          %273 = sbr.rel (%p271) target = $region40
        $region39: #{tpu_custom_call.1} parent=27 // pred_region
          %s275 = ssub.s32 16, 16
          %276 = vsyncadd %s268, %s275
          %s277 = smul.addr %s22, 16
          %s278 = scalar_lea.hbm %s2, %s277
          %s280 = sshll.u32 %s270, 4
          %s281 = int_to_ptr.vmem [resolvable:$true] %s280
          %283 = dma.vmem_to_hbm [thread:$0]  %s281, 16, %s278, %s268
        $region40: #{tpu_custom_call.1} parent=27 // pred_fallthru
          _
      $region28: #{tpu_custom_call.1} parent=5 // pred_fallthru
        _
      %p284 = scmp.le.s32.totalorder 2, %s17
      // Predicated region
      $region41: #{tpu_custom_call.1} parent=5 // pred_check
        %p285 = pneg %p284
      $region42: #{tpu_custom_call.1} parent=5 // pred_check_branch
        %287 = sbr.rel (%p285) target = $region44
      $region43: #{tpu_custom_call.1} parent=5 // pred_region
        %s288 = ssub.s32 %s17, 2
        // Predicated region
        $region45: #{tpu_custom_call.1} parent=43 // pred_check
          %p289 = pneg %p98
        $region46: #{tpu_custom_call.1} parent=43 // pred_check_branch
          %291 = sbr.rel (%p289) target = $region48
        $region47: #{tpu_custom_call.1} parent=43 // pred_region
          %s292 = sand.u32 %s83, 1
          %s293 = scalar_lea.sflag [#allocation4], %s292
          %s294 = sand.u32 %s83, 1
          %s295 = scalar_lea.vmem [#allocation7], %s294
          %296 = dma.done %s293, 16
        $region48: #{tpu_custom_call.1} parent=43 // pred_fallthru
          _
      $region44: #{tpu_custom_call.1} parent=5 // pred_fallthru
        _
    $region6: #{tpu_custom_call.1} parent=1 // loop_footer
      %s21 = sadd.s32 1, %s17
    $region7: #{tpu_custom_call.1} parent=1 // loop_footer_branch
      %16 = sbr.rel target = $region3
    $region8: #{tpu_custom_call.1} parent=1 // loop_exit
      _
    %297 = vsyncpa [#allocation3], 1
    %s298 = scalar_lea.sflag [#allocation3], 1
    %299 = vsyncpa %s298, 1
    %300 = vsyncpa [#allocation6], 1
    %s301 = scalar_lea.sflag [#allocation6], 1
    %302 = vsyncpa %s301, 1
    %303 = vsyncpa [#allocation4], 1
    %s304 = scalar_lea.sflag [#allocation4], 1
    %305 = vsyncpa %s304, 1

</llo_original>
